<compile_context>
chip_gen: v5e
topology: v5e:2x2
jax: 0.10.0
libtpu: 0.0.40
codegen_flags: <defaults>
</compile_context>

<pallas_src>
import functools

import jax
import jax.numpy as jnp
from jax.experimental import pallas as pl
from jax.experimental.pallas import tpu as pltpu


# ~8 MiB per input block (double-buffered by the Pallas pipeline): big enough
# to amortize the ~0.35 us fixed grid-step cost on every generation, small
# enough to leave ample headroom even on v7x's 64 MiB per-TC VMEM.
_TARGET_BLOCK_BYTES = 8 * 1024 * 1024
# Only split the batch axis for cross-core parallelism when each resulting
# batch slice still carries at least this much data.
_MIN_PARALLEL_SLICE_BYTES = 512 * 1024
# Below this total input size a bare jnp.mean beats kernel-launch overhead.
_SMALL_INPUT_BYTES = 1 * 1024 * 1024


# --------------------------------------------------------------------------
# Kernels
# --------------------------------------------------------------------------
def _mean_kernel_acc_in_output(x_ref, o_ref, *, inv_t):
    """Mean over axis 1; output dtype is f32, accumulate directly in o_ref.

    x_ref: (b_tile, t_tile, d_tile) VMEM tile
    o_ref: (b_tile, d_tile) f32 VMEM tile, resident across the T grid axis.
    """
    k = pl.program_id(2)

    @pl.when(k == 0)
    def _():
        o_ref[...] = jnp.zeros_like(o_ref)

    o_ref[...] += jnp.sum(x_ref[...].astype(jnp.float32), axis=1)

    @pl.when(k == pl.num_programs(2) - 1)
    def _():
        o_ref[...] = o_ref[...] * inv_t


def _mean_kernel_scratch(x_ref, o_ref, acc_ref, *, inv_t):
    """Mean over axis 1 with an f32 scratch accumulator (narrow output dtypes)."""
    k = pl.program_id(2)

    @pl.when(k == 0)
    def _():
        acc_ref[...] = jnp.zeros_like(acc_ref)

    acc_ref[...] += jnp.sum(x_ref[...].astype(jnp.float32), axis=1)

    @pl.when(k == pl.num_programs(2) - 1)
    def _():
        o_ref[...] = (acc_ref[...] * inv_t).astype(o_ref.dtype)


# --------------------------------------------------------------------------
# Tile / padding planner
# --------------------------------------------------------------------------
def _sublane_multiple(dtype):
    itemsize = jnp.dtype(dtype).itemsize
    return max(8, 32 // max(1, itemsize))  # 8 for f32, 16 for bf16, 32 for int8


def _largest_aligned_divisor(n, align, limit):
    """Largest divisor of n that is a multiple of `align` and <= limit.

    Assumes n % align == 0; falls back to `align` if nothing else fits.
    """
    best = align
    cand = align
    cap = min(n, limit)
    while cand <= cap:
        if n % cand == 0:
            best = cand
        cand += align
    return best


def _plan_tiles(B, T, D, dtype):
    """Pick (b_tile, t_tile, d_tile) and (pad_b, pad_t, pad_d).

    Honors the TPU (sublane, 128) block constraints and keeps each input block
    near (and bounded by) _TARGET_BLOCK_BYTES.  Splitting order: T, then B,
    and only then D (full-D tiles keep every HBM slab contiguous).
    """
    itemsize = jnp.dtype(dtype).itemsize
    sub = _sublane_multiple(dtype)
    target = _TARGET_BLOCK_BYTES

    # Row count any block carries once B/T are split down to their minimum
    # legal tiles (sublane multiple, or the full dim when it is smaller).
    min_rows = min(B, sub) * min(T, sub)

    # ---- Feature axis: prefer full D (contiguous slabs).  Only pad to 128
    # and split when even a minimal-row block of full D exceeds the budget.
    pad_d = 0
    d_tile = D
    if min_rows * D * itemsize > target:
        pad_d = (-D) % 128
        d_tile = _largest_aligned_divisor(
            D + pad_d, 128, max(128, target // (min_rows * itemsize)))
    D_pad = D + pad_d

    row_budget = max(1, target // (d_tile * itemsize))

    # ---- Batch lower bound: output blocks need b_tile % sub == 0 or full B.
    # Pad B only when full-extent batch blocks can't meet the budget even with
    # a minimal sequence tile.
    pad_b = 0
    if B % sub == 0:
        b_min = sub
    elif B * min(T, sub) <= row_budget:
        b_min = B  # full-extent batch tile, still within budget
    else:
        pad_b = (-B) % sub
        b_min = sub
    B_pad = B + pad_b

    # ---- Sequence (reduction) axis: biggest aligned tile within what the
    # budget leaves after the minimum batch tile.  Pad T only when needed.
    t_budget = max(1, row_budget // b_min)
    pad_t = 0
    if T <= t_budget:
        t_tile = T  # full extent (legal even if unaligned)
    else:
        pad_t = (-T) % sub
        t_tile = _largest_aligned_divisor(T + pad_t, sub, max(sub, t_budget))
    T_pad = T + pad_t

    # ---- Batch tile: biggest aligned tile in the remaining budget.  On large
    # inputs, cap at B_pad // 2 so grid axis 0 has >= 2 parallel points and
    # v7x's two TensorCores both get work on the contiguous batch axis.
    b_budget = max(b_min, row_budget // t_tile)
    total_bytes = B_pad * T_pad * D_pad * itemsize
    if B_pad % sub == 0:
        cap = min(B_pad, b_budget)
        if B_pad >= 2 * sub and total_bytes >= 2 * _MIN_PARALLEL_SLICE_BYTES:
            cap = min(cap, max(sub, B_pad // 2))
        b_tile = _largest_aligned_divisor(B_pad, sub, cap)
    else:
        b_tile = B_pad  # small unaligned batch: full-extent tile

    return (b_tile, t_tile, d_tile), (pad_b, pad_t, pad_d)


# --------------------------------------------------------------------------
# Forward wrapper
# --------------------------------------------------------------------------
def simple_avg_aggregator_forward(x, intermediate=None, *, use_pallas=None):
    """Pallas equivalent of SimpleAvgAggregator.forward(x, intermediate)."""
    del intermediate  # unused in the PyTorch forward as well
    B, T, D = x.shape
    out_dtype = x.dtype
    itemsize = jnp.dtype(x.dtype).itemsize

    if use_pallas is None:
        # Tiny problems are launch-overhead dominated; let XLA handle them.
        use_pallas = (B * T * D * itemsize) >= _SMALL_INPUT_BYTES
    if not use_pallas:
        return jnp.mean(x, axis=1).astype(out_dtype)

    (b_tile, t_tile, d_tile), (pad_b, pad_t, pad_d) = _plan_tiles(B, T, D, x.dtype)

    # Zero-pad where the planner asked for alignment; inv_t stays 1/T so the
    # padded rows do not bias the mean.
    if pad_b or pad_t or pad_d:
        x = jnp.pad(x, ((0, pad_b), (0, pad_t), (0, pad_d)))
    B_pad, T_pad, D_pad = B + pad_b, T + pad_t, D + pad_d
    assert B_pad % b_tile == 0 and T_pad % t_tile == 0 and D_pad % d_tile == 0

    grid = (B_pad // b_tile, D_pad // d_tile, T_pad // t_tile)
    inv_t = 1.0 / T

    # float32 outputs accumulate directly into the resident output block; keep
    # an f32 VMEM scratch only for narrower output dtypes.
    acc_in_output = jnp.dtype(out_dtype) == jnp.dtype(jnp.float32)
    if acc_in_output:
        kernel = functools.partial(_mean_kernel_acc_in_output, inv_t=inv_t)
        scratch_shapes = []
        scratch_bytes = 0
    else:
        kernel = functools.partial(_mean_kernel_scratch, inv_t=inv_t)
        scratch_shapes = [pltpu.VMEM((b_tile, d_tile), jnp.float32)]
        scratch_bytes = b_tile * d_tile * 4

    # Honest VMEM request: double-buffered input + output + scratch + headroom.
    in_blk = b_tile * t_tile * d_tile * itemsize
    out_blk = b_tile * d_tile * jnp.dtype(out_dtype).itemsize
    vmem_need = 2 * in_blk + 2 * out_blk + scratch_bytes + (4 << 20)
    vmem_limit = min(max(vmem_need, 16 << 20), 64 << 20)

    out = pl.pallas_call(
        kernel,
        out_shape=jax.ShapeDtypeStruct((B_pad, D_pad), out_dtype),
        grid_spec=pltpu.PrefetchScalarGridSpec(
            num_scalar_prefetch=0,
            grid=grid,
            in_specs=[
                pl.BlockSpec((b_tile, t_tile, d_tile), lambda i, j, k: (i, k, j)),
            ],
            out_specs=pl.BlockSpec((b_tile, d_tile), lambda i, j, k: (i, j)),
            scratch_shapes=scratch_shapes,
        ),
        compiler_params=pltpu.CompilerParams(
            dimension_semantics=("parallel", "parallel", "arbitrary"),
            vmem_limit_bytes=vmem_limit,
        ),
    )(x)

    if pad_b or pad_d:
        out = out[:B, :D]
    return out


def compress_intermediate(intermediate):
    # Matches PyTorch: returns ones((B, C)) regardless of the values.
    # TODO(synk): trivial constant construction — no Pallas kernel needed.
    assert intermediate.ndim == 4
    B, C, H, W = intermediate.shape
    return jnp.ones((B, C), dtype=intermediate.dtype)


if __name__ == "__main__":
    key = jax.random.PRNGKey(0)
    kx, ki, kx2, kx3 = jax.random.split(key, 4)

    # Small shapes consistent with the module.
    B, T, D = 4, 8, 256          # batch, sequence length, feature dim
    C, H, W = 4, 16, 16          # intermediate (NCHW), unused by forward

    x = jax.random.normal(kx, (B, T, D), dtype=jnp.float32)
    intermediate = jax.random.normal(ki, (B, C, H, W), dtype=jnp.float32)

    # Force the Pallas path so the kernel is exercised even at toy sizes.
    out = simple_avg_aggregator_forward(x, intermediate, use_pallas=True)
    out = jax.block_until_ready(out)
    ref = jnp.mean(x, axis=1)
    assert out.shape == (B, D)
    assert out.dtype == x.dtype
    assert jnp.allclose(out, ref, atol=1e-5, rtol=1e-5)

    # Larger shape: batch splits into >= 2 parallel grid points, full-D slabs.
    B2, T2, D2 = 16, 16, 1024
    x2 = jax.random.normal(kx2, (B2, T2, D2), dtype=jnp.float32)
    out2 = jax.block_until_ready(
        simple_avg_aggregator_forward(x2, None, use_pallas=True)
    )
    ref2 = jnp.mean(x2, axis=1)
    assert out2.shape == (B2, D2)
    assert jnp.allclose(out2, ref2, atol=1e-5, rtol=1e-5)

    # bfloat16 path (exercises the f32 scratch accumulator + dtype-aware tiles).
    x3 = jax.random.normal(kx3, (8, 16, 512), dtype=jnp.bfloat16)
    out3 = jax.block_until_ready(
        simple_avg_aggregator_forward(x3, None, use_pallas=True)
    )
    ref3 = jnp.mean(x3.astype(jnp.float32), axis=1).astype(jnp.bfloat16)
    assert out3.shape == (8, 512)
    assert out3.dtype == jnp.bfloat16
    assert jnp.allclose(out3.astype(jnp.float32), ref3.astype(jnp.float32),
                        atol=2e-2, rtol=2e-2)

    # Unaligned B/T/D (full-extent tiles, still correct).
    x4 = jax.random.normal(kx, (6, 12, 192), dtype=jnp.float32)
    out4 = jax.block_until_ready(
        simple_avg_aggregator_forward(x4, None, use_pallas=True)
    )
    ref4 = jnp.mean(x4, axis=1)
    assert out4.shape == (6, 192)
    assert jnp.allclose(out4, ref4, atol=1e-5, rtol=1e-5)

    # compress_intermediate glue.
    ones = jax.block_until_ready(compress_intermediate(intermediate))
    assert ones.shape == (B, C)
    assert jnp.all(ones == 1)

    print("KERNEL_OK")
</pallas_src>

<mosaic_0001>
module attributes {stable_mosaic.version = 11 : i64} {
  func.func @_mean_kernel_acc_in_output(%arg0: i32, %arg1: i32, %arg2: i32, %arg3: memref<4x8x256xf32, #tpu.memory_space<vmem>>, %arg4: memref<4x256xf32, #tpu.memory_space<vmem>>) attributes {dimension_semantics = [#tpu.dimension_semantics<parallel>, #tpu.dimension_semantics<parallel>, #tpu.dimension_semantics<arbitrary>], iteration_bounds = array<i64: 1, 1, 1>, scalar_prefetch = 0 : i64, scratch_operands = 0 : i64, tpu.core_type = #tpu.core_type<tc>, window_params = [{transform_indices = @transform_0, window_bounds = array<i64: 4, 8, 256>}, {transform_indices = @transform_1, window_bounds = array<i64: 4, 256>}]} {
    %c0_i32 = arith.constant 0 : i32
    %0 = arith.cmpi eq, %arg2, %c0_i32 : i32
    %1 = arith.extui %0 : i1 to i32
    %c0_i32_0 = arith.constant 0 : i32
    %2 = arith.cmpi ne, %1, %c0_i32_0 : i32
    scf.if %2 {
      %cst_9 = arith.constant 0.000000e+00 : f32
      %11 = vector.broadcast %cst_9 : f32 to vector<4x256xf32>
      %c0_10 = arith.constant 0 : index
      %c0_11 = arith.constant 0 : index
      %12 = vector.load %arg4[%c0_10, %c0_11] : memref<4x256xf32, #tpu.memory_space<vmem>>, vector<4x256xf32>
      tpu.vector_store %arg4[%c0_10, %c0_11], %11 {strides = array<i32>} : memref<4x256xf32, #tpu.memory_space<vmem>>, vector<4x256xf32>,
    } else {
    }
    %c0 = arith.constant 0 : index
    %c0_1 = arith.constant 0 : index
    %3 = vector.load %arg4[%c0, %c0_1] : memref<4x256xf32, #tpu.memory_space<vmem>>, vector<4x256xf32>
    %c0_2 = arith.constant 0 : index
    %c0_3 = arith.constant 0 : index
    %c0_4 = arith.constant 0 : index
    %4 = vector.load %arg3[%c0_2, %c0_3, %c0_4] : memref<4x8x256xf32, #tpu.memory_space<vmem>>, vector<4x8x256xf32>
    %cst = arith.constant dense<0.000000e+00> : vector<4x256xf32>
    %5 = vector.multi_reduction <add>, %4, %cst [1] : vector<4x8x256xf32> to vector<4x256xf32>
    %6 = arith.addf %3, %5 : vector<4x256xf32>
    %c0_5 = arith.constant 0 : index
    %c0_6 = arith.constant 0 : index
    %7 = vector.load %arg4[%c0_5, %c0_6] : memref<4x256xf32, #tpu.memory_space<vmem>>, vector<4x256xf32>
    tpu.vector_store %arg4[%c0_5, %c0_6], %6 {strides = array<i32>} : memref<4x256xf32, #tpu.memory_space<vmem>>, vector<4x256xf32>,
    %c0_i32_7 = arith.constant 0 : i32
    %8 = arith.cmpi eq, %arg2, %c0_i32_7 : i32
    %9 = arith.extui %8 : i1 to i32
    %c0_i32_8 = arith.constant 0 : i32
    %10 = arith.cmpi ne, %9, %c0_i32_8 : i32
    scf.if %10 {
      %c0_9 = arith.constant 0 : index
      %c0_10 = arith.constant 0 : index
      %11 = vector.load %arg4[%c0_9, %c0_10] : memref<4x256xf32, #tpu.memory_space<vmem>>, vector<4x256xf32>
      %cst_11 = arith.constant 1.250000e-01 : f32
      %12 = vector.broadcast %cst_11 : f32 to vector<4x256xf32>
      %13 = arith.mulf %11, %12 : vector<4x256xf32>
      %c0_12 = arith.constant 0 : index
      %c0_13 = arith.constant 0 : index
      %14 = vector.load %arg4[%c0_12, %c0_13] : memref<4x256xf32, #tpu.memory_space<vmem>>, vector<4x256xf32>
      tpu.vector_store %arg4[%c0_12, %c0_13], %13 {strides = array<i32>} : memref<4x256xf32, #tpu.memory_space<vmem>>, vector<4x256xf32>,
    } else {
    }
    return
  }
  func.func @transform_0(%arg0: i32, %arg1: i32, %arg2: i32) -> (i32, i32, i32) {
    %c0_i32 = arith.constant 0 : i32
    return %arg0, %arg2, %arg1 : i32, i32, i32
  }
  func.func @transform_1(%arg0: i32, %arg1: i32, %arg2: i32) -> (i32, i32) {
    %c0_i32 = arith.constant 0 : i32
    return %arg0, %arg1 : i32, i32
  }
}

</mosaic_0001>

<llo_original>
// kernel: tpu_custom_call.1
$region0: #{tpu_custom_call.1}
  #allocation0 [shape = 'u32[]', space=smem, size = 0x4, offset = 0x4, fixed_abs, tag = 'smem constant byte address 0x4 - core index']
  #allocation1 [shape = 'u32[72,128]{1,0:T(1,128)}', space=vmem, size = 0x9000, scoped, tag = 'internal scratch']
  %s0 = inlined_call_operand.hbm [shape: f32[4,8,256], index: 0, kind: input, shape index: {}]
  %s1 = inlined_call_operand.hbm [shape: f32[4,256], index: 1, kind: output, shape index: {}]
  %s2 = sld [smem:[#allocation0]]
  $region26: #{tpu_custom_call.1} parent=0
    _
  %s4 = ssub.s32 1, %s2
  %s5 = scalar_select 0, %s4, %s2
  $region1: #{tpu_custom_call.1} parent=0
    #allocation2 [shape = 'u8[32768]{0}', space=vmem, size = 0x8000, scoped, tag = 'input window, operand 0, single buffered']
    #allocation3 [shape = 's32[1]{0}', space=sflag, size = 0x4, scoped, tag = 'scoped memory for tpu_custom_call.1']
    #allocation4 [shape = 's32[1]{0}', space=sflag, size = 0x4, scoped, tag = 'scoped memory for tpu_custom_call.1']
    #allocation5 [shape = 'u8[4096]{0}', space=vmem, size = 0x1000, scoped, tag = 'output window, operand 0, single buffered']
    %6 = vsyncpa [#allocation3], 0
    %7 = vsyncpa [#allocation4], 0
    // Predicated region
    $region2: #{tpu_custom_call.1} parent=1 // pred_check
      _
    $region3: #{tpu_custom_call.1} parent=1 // pred_check_branch
      %9 = sbr.rel (0) target = $region5
    $region4: #{tpu_custom_call.1} parent=1 // pred_region
      %11 = vsyncadd [#allocation3], 0
      %s12 = sshll.u32 %s0, 4
      %s13 = int_to_ptr.hbm [resolvable:$true] %s12
      %s14 = sshll.u32 [#allocation2], 4
      %s15 = int_to_ptr.vmem [resolvable:$true] %s14
      %20 = dma.hbm_to_vmem [thread:$0]  %s13, 1024, %s15, [#allocation3], 256, 256, 16
    $region5: #{tpu_custom_call.1} parent=1 // pred_fallthru
      _
    // Predicated region
    $region6: #{tpu_custom_call.1} parent=1 // pred_check
      _
    $region7: #{tpu_custom_call.1} parent=1 // pred_check_branch
      %22 = sbr.rel (0) target = $region9
    $region8: #{tpu_custom_call.1} parent=1 // pred_region
      %24 = dma.done [#allocation3], 1024
    $region9: #{tpu_custom_call.1} parent=1 // pred_fallthru
      _
    %p25 = scmp.eq.s32.totalorder 0, 0
    // Predicated region
    $region10: #{tpu_custom_call.1} parent=1 // pred_check
      %p26 = pneg %p25
    $region11: #{tpu_custom_call.1} parent=1 // pred_check_branch
      %28 = sbr.rel (%p26) target = $region13
    $region12: #{tpu_custom_call.1} parent=1 // pred_region
      %29 = vst [vmem:[#allocation5] sm:$0xff] 0.0
    $region13: #{tpu_custom_call.1} parent=1 // pred_fallthru
      _
    %v30 = vld [vmem:[#allocation5] sm:$0xff]
    %v31 = vld [vmem:[#allocation2] sm:$0xff]
    %v32 = vld [vmem:[#allocation2 + $0x8] sm:$0xff]
    %v33 = vld [vmem:[#allocation2 + $0x10] sm:$0xff]
    %v34 = vld [vmem:[#allocation2 + $0x18] sm:$0xff]
    %v35 = vld [vmem:[#allocation2 + $0x20] sm:$0xff]
    %v36 = vld [vmem:[#allocation2 + $0x28] sm:$0xff]
    %v37 = vld [vmem:[#allocation2 + $0x30] sm:$0xff]
    %v38 = vld [vmem:[#allocation2 + $0x38] sm:$0xff]
    %v39 = vrot.slane %v31, 4
    %v40 = vadd.f32 %v31, %v39
    %v41 = vrot.slane %v40, 2
    %v42 = vadd.f32 %v40, %v41
    %v43 = vrot.slane %v42, 1
    %v44 = vadd.f32 %v42, %v43
    %v45 = vrot.slane %v32, 4
    %v46 = vadd.f32 %v32, %v45
    %v47 = vrot.slane %v46, 2
    %v48 = vadd.f32 %v46, %v47
    %v49 = vrot.slane %v48, 1
    %v50 = vadd.f32 %v48, %v49
    %v51 = vrot.slane %v33, 4
    %v52 = vadd.f32 %v33, %v51
    %v53 = vrot.slane %v52, 2
    %v54 = vadd.f32 %v52, %v53
    %v55 = vrot.slane %v54, 1
    %v56 = vadd.f32 %v54, %v55
    %v57 = vrot.slane %v34, 4
    %v58 = vadd.f32 %v34, %v57
    %v59 = vrot.slane %v58, 2
    %v60 = vadd.f32 %v58, %v59
    %v61 = vrot.slane %v60, 1
    %v62 = vadd.f32 %v60, %v61
    %v63 = vrot.slane %v35, 4
    %v64 = vadd.f32 %v35, %v63
    %v65 = vrot.slane %v64, 2
    %v66 = vadd.f32 %v64, %v65
    %v67 = vrot.slane %v66, 1
    %v68 = vadd.f32 %v66, %v67
    %v69 = vrot.slane %v36, 4
    %v70 = vadd.f32 %v36, %v69
    %v71 = vrot.slane %v70, 2
    %v72 = vadd.f32 %v70, %v71
    %v73 = vrot.slane %v72, 1
    %v74 = vadd.f32 %v72, %v73
    %v75 = vrot.slane %v37, 4
    %v76 = vadd.f32 %v37, %v75
    %v77 = vrot.slane %v76, 2
    %v78 = vadd.f32 %v76, %v77
    %v79 = vrot.slane %v78, 1
    %v80 = vadd.f32 %v78, %v79
    %v81 = vrot.slane %v38, 4
    %v82 = vadd.f32 %v38, %v81
    %v83 = vrot.slane %v82, 2
    %v84 = vadd.f32 %v82, %v83
    %v85 = vrot.slane %v84, 1
    %v86 = vadd.f32 %v84, %v85
    %v95 = vrot.slane %v50, 4
    %v96 = vrot.slane %v62, 4
    %v97 = vrot.slane %v74, 4
    %v98 = vrot.slane %v86, 4
    %vm99 = vcmask 1043456
    %v100 = vsel %vm99, %v44, %v95
    %v101 = vsel %vm99, %v56, %v96
    %v102 = vsel %vm99, %v68, %v97
    %v103 = vsel %vm99, %v80, %v98
    %v104 = vrot.slane %v101, 7
    %vm105 = vcmask 1041409
    %v106 = vsel %vm105, %v104, %v100
    %vm107 = vcmask 1045509
    %v108 = vsel %vm107, %v104, %v106
    %v109 = vrot.slane %v102, 6
    %vm110 = vcmask 1042434
    %v111 = vsel %vm110, %v109, %v108
    %vm112 = vcmask 1046534
    %v113 = vsel %vm112, %v109, %v111
    %v114 = vrot.slane %v103, 5
    %vm115 = vcmask 1043459
    %v116 = vsel %vm115, %v114, %v113
    %vm117 = vcmask 1047559
    %v118 = vsel %vm117, %v114, %v116
    %v120 = vadd.f32 %v30, %v118
    %121 = vst [vmem:[#allocation5] sm:$0xff] %v120
    // Predicated region
    $region14: #{tpu_custom_call.1} parent=1 // pred_check
      %p122 = pneg %p25
    $region15: #{tpu_custom_call.1} parent=1 // pred_check_branch
      %124 = sbr.rel (%p122) target = $region17
    $region16: #{tpu_custom_call.1} parent=1 // pred_region
      %v125 = vld [vmem:[#allocation5] sm:$0xff]
      %v126 = vmul.f32 %v125, 0.125
      %127 = vst [vmem:[#allocation5] sm:$0xff] %v126
    $region17: #{tpu_custom_call.1} parent=1 // pred_fallthru
      _
    // Predicated region
    $region18: #{tpu_custom_call.1} parent=1 // pred_check
      _
    $region19: #{tpu_custom_call.1} parent=1 // pred_check_branch
      %129 = sbr.rel (0) target = $region21
    $region20: #{tpu_custom_call.1} parent=1 // pred_region
      %131 = vsyncadd [#allocation4], 0
      %s133 = sshll.u32 [#allocation5], 4
      %s134 = int_to_ptr.vmem [resolvable:$true] %s133
      %s135 = sshll.u32 %s1, 4
      %s136 = int_to_ptr.hbm [resolvable:$true] %s135
      %138 = dma.vmem_to_hbm [thread:$0]  %s134, 128, %s136, [#allocation4]
    $region21: #{tpu_custom_call.1} parent=1 // pred_fallthru
      _
    // Predicated region
    $region22: #{tpu_custom_call.1} parent=1 // pred_check
      _
    $region23: #{tpu_custom_call.1} parent=1 // pred_check_branch
      %140 = sbr.rel (0) target = $region25
    $region24: #{tpu_custom_call.1} parent=1 // pred_region
      %142 = dma.done [#allocation4], 128
    $region25: #{tpu_custom_call.1} parent=1 // pred_fallthru
      _
    %143 = vsyncpa [#allocation3], 1
    %144 = vsyncpa [#allocation4], 1

</llo_original>
